<compile_context>
chip_gen: v7x
topology: tpu7x:2x2x1
jax: 0.10.0
libtpu: 0.0.40
codegen_flags: <defaults>
</compile_context>

<pallas_src>
import functools

import jax
import jax.numpy as jnp
from jax.experimental import pallas as pl
from jax.experimental.pallas import tpu as pltpu


def _round_up(n, m):
    return ((n + m - 1) // m) * m


def comp_fnn_kernel(x_ref,
                    w1_ref, b1_ref,
                    w2_ref, b2_ref,
                    w3_ref, b3_ref,
                    o_ref):
    # x arrives bf16 straight from HBM (no post-DMA downcast needed).
    x = x_ref[...]

    # layer 1: fc1 (+ folded BN1) -> relu
    z1 = jnp.dot(x, w1_ref[...], preferred_element_type=jnp.float32) + b1_ref[...]
    h1 = jnp.maximum(z1, 0.0).astype(jnp.bfloat16)

    # layer 2: fc2 (+ folded BN2) -> relu
    z2 = jnp.dot(h1, w2_ref[...], preferred_element_type=jnp.float32) + b2_ref[...]
    h2 = jnp.maximum(z2, 0.0).astype(jnp.bfloat16)

    # layer 3: fc3 -> relu
    z3 = jnp.dot(h2, w3_ref[...], preferred_element_type=jnp.float32) + b3_ref[...]
    o_ref[...] = jnp.maximum(z3, 0.0).astype(o_ref.dtype)


@functools.partial(jax.jit, static_argnames=("tile_b", "out_dtype"))
def comp_fnn_forward(x, params, *, tile_b=8192, out_dtype=jnp.bfloat16):
    """x: (B, input_size), any float dtype (ideally already bf16).

    Returns (B, 16) in `out_dtype` (default bf16; pass jnp.float32 if the
    consumer needs it).
    """
    B, input_size = x.shape
    eps = 1e-5  # nn.BatchNorm1d default

    # ---- fold BatchNorm running stats + affine into fc weights/biases (glue)
    s1 = params["bn1_gamma"] / jnp.sqrt(params["bn1_var"] + eps)
    t1 = params["bn1_beta"] - params["bn1_mean"] * s1
    s2 = params["bn2_gamma"] / jnp.sqrt(params["bn2_var"] + eps)
    t2 = params["bn2_beta"] - params["bn2_mean"] * s2

    w1 = (params["w1"] * s1[None, :]).astype(jnp.bfloat16)
    b1 = (params["b1"] * s1 + t1)[None, :].astype(jnp.float32)
    w2 = (params["w2"] * s2[None, :]).astype(jnp.bfloat16)
    b2 = (params["b2"] * s2 + t2)[None, :].astype(jnp.float32)
    w3 = params["w3"].astype(jnp.bfloat16)
    b3 = params["b3"][None, :].astype(jnp.float32)

    # x enters the kernel in bf16 so the dominant HBM stream is halved.  If the
    # caller already provides bf16 (preferred), this astype is a no-op.
    x = x.astype(jnp.bfloat16)

    # ---- static batch-tile selection (no padding; Pallas clamps the last block)
    # (a) keep >= 2 grid steps when possible so both v7x TensorCores get work
    two_core_cap = _round_up(-(-B // 2), 8)
    # (b) VMEM budget: 2x double-buffered bf16 x block + 2x bf16 out block +
    #     f32 intermediates (h1:64, h2:32) + slack, per row.
    per_row_bytes = 2 * input_size * 2 + 2 * 16 * 2 + (64 + 32 + 64) * 4
    vmem_block_budget = 24 * 1024 * 1024
    budget_cap = max(8, (vmem_block_budget // per_row_bytes) // 8 * 8)
    TILE_B = max(8, min(tile_b, two_core_cap, budget_cap))
    grid = (pl.cdiv(B, TILE_B),)

    # weights / biases: whole array, constant index_map -> DMA'd once, resident
    def resident(arr):
        return pl.BlockSpec(arr.shape, lambda i: (0,) * arr.ndim)

    out = pl.pallas_call(
        comp_fnn_kernel,
        out_shape=jax.ShapeDtypeStruct((B, 16), out_dtype),
        grid=grid,
        in_specs=[
            pl.BlockSpec((TILE_B, input_size), lambda i: (i, 0)),   # x tiles
            resident(w1), resident(b1),
            resident(w2), resident(b2),
            resident(w3), resident(b3),
        ],
        out_specs=pl.BlockSpec((TILE_B, 16), lambda i: (i, 0)),
        compiler_params=pltpu.CompilerParams(
            dimension_semantics=("parallel",),
            vmem_limit_bytes=40 * 1024 * 1024,
        ),
    )(x, w1, b1, w2, b2, w3, b3)

    return out


def init_params(key, input_size):
    """Deterministic synthetic init (PyTorch-like shapes, kaiming-ish scale)."""
    ks = jax.random.split(key, 10)

    def lin(kw, kb, fan_in, fan_out):
        bound = 1.0 / jnp.sqrt(fan_in)
        # stored as (in, out) so the kernel computes x @ W  (== x @ W_torch.T)
        w = jax.random.uniform(kw, (fan_in, fan_out), jnp.float32, -bound, bound)
        b = jax.random.uniform(kb, (fan_out,), jnp.float32, -bound, bound)
        return w, b

    w1, b1 = lin(ks[0], ks[1], input_size, 64)
    w2, b2 = lin(ks[2], ks[3], 64, 32)
    w3, b3 = lin(ks[4], ks[5], 32, 16)

    # BatchNorm: affine init (gamma=1, beta=0) but non-trivial running stats
    # so the BN folding path is exercised.
    bn1_mean = 0.1 * jax.random.normal(ks[6], (64,), jnp.float32)
    bn1_var = jnp.abs(1.0 + 0.1 * jax.random.normal(ks[7], (64,), jnp.float32))
    bn2_mean = 0.1 * jax.random.normal(ks[8], (32,), jnp.float32)
    bn2_var = jnp.abs(1.0 + 0.1 * jax.random.normal(ks[9], (32,), jnp.float32))

    return dict(
        w1=w1, b1=b1, w2=w2, b2=b2, w3=w3, b3=b3,
        bn1_gamma=jnp.ones((64,), jnp.float32), bn1_beta=jnp.zeros((64,), jnp.float32),
        bn1_mean=bn1_mean, bn1_var=bn1_var,
        bn2_gamma=jnp.ones((32,), jnp.float32), bn2_beta=jnp.zeros((32,), jnp.float32),
        bn2_mean=bn2_mean, bn2_var=bn2_var,
    )


def comp_fnn_reference(x, params):
    """Pure-JAX f32 reference of the eval-mode PyTorch forward, for validation."""
    eps = 1e-5
    x = x.astype(jnp.float32)
    z1 = x @ params["w1"] + params["b1"]
    z1 = (z1 - params["bn1_mean"]) / jnp.sqrt(params["bn1_var"] + eps)
    z1 = z1 * params["bn1_gamma"] + params["bn1_beta"]
    h1 = jnp.maximum(z1, 0.0)
    z2 = h1 @ params["w2"] + params["b2"]
    z2 = (z2 - params["bn2_mean"]) / jnp.sqrt(params["bn2_var"] + eps)
    z2 = z2 * params["bn2_gamma"] + params["bn2_beta"]
    h2 = jnp.maximum(z2, 0.0)
    return jnp.maximum(h2 @ params["w3"] + params["b3"], 0.0)


if __name__ == "__main__":
    key = jax.random.PRNGKey(0)
    k_x, k_x2, k_p = jax.random.split(key, 3)

    input_size = 32
    params = init_params(k_p, input_size)

    # TODO(synk): training-mode stochastic dropout + batch-stat BN are not
    # implemented in the kernel (eval-mode semantics only).

    # --- case 1: small aligned batch ("upstream" hands us bf16 directly) -----
    batch = 8
    x = jax.random.normal(k_x, (batch, input_size), jnp.float32).astype(jnp.bfloat16)
    out = jax.block_until_ready(comp_fnn_forward(x, params))
    ref = comp_fnn_reference(x, params)
    assert out.shape == (batch, 16)
    # Tolerance relaxed vs the f32 reference: bf16 matmul operands + bf16 output.
    assert jnp.allclose(out.astype(jnp.float32), ref, atol=5e-2, rtol=5e-2), \
        "mismatch vs JAX reference (aligned batch)"

    # --- case 2: ragged batch exercises last-block clamping (no jnp.pad) -----
    batch2 = 13
    x2 = jax.random.normal(k_x2, (batch2, input_size), jnp.float32).astype(jnp.bfloat16)
    out2 = jax.block_until_ready(comp_fnn_forward(x2, params))
    ref2 = comp_fnn_reference(x2, params)
    assert out2.shape == (batch2, 16)
    assert jnp.allclose(out2.astype(jnp.float32), ref2, atol=5e-2, rtol=5e-2), \
        "mismatch vs JAX reference (ragged batch)"

    print("KERNEL_OK")
</pallas_src>

<mosaic_0001>
module attributes {stable_mosaic.version = 11 : i64} {
  func.func @comp_fnn_kernel(%arg0: i32, %arg1: memref<8x32xbf16, #tpu.memory_space<vmem>>, %arg2: memref<32x64xbf16, #tpu.memory_space<vmem>>, %arg3: memref<1x64xf32, #tpu.memory_space<vmem>>, %arg4: memref<64x32xbf16, #tpu.memory_space<vmem>>, %arg5: memref<1x32xf32, #tpu.memory_space<vmem>>, %arg6: memref<32x16xbf16, #tpu.memory_space<vmem>>, %arg7: memref<1x16xf32, #tpu.memory_space<vmem>>, %arg8: memref<8x16xbf16, #tpu.memory_space<vmem>>) attributes {dimension_semantics = [#tpu.dimension_semantics<parallel>], iteration_bounds = array<i64: 1>, scalar_prefetch = 0 : i64, scratch_operands = 0 : i64, tpu.core_type = #tpu.core_type<tc>, window_params = [{transform_indices = @transform_0, window_bounds = array<i64: 8, 32>}, {pipeline_mode = #tpu.pipeline_mode<synchronous>, transform_indices = @transform_1, window_bounds = array<i64: 32, 64>}, {pipeline_mode = #tpu.pipeline_mode<synchronous>, transform_indices = @transform_2, window_bounds = array<i64: 1, 64>}, {pipeline_mode = #tpu.pipeline_mode<synchronous>, transform_indices = @transform_3, window_bounds = array<i64: 64, 32>}, {pipeline_mode = #tpu.pipeline_mode<synchronous>, transform_indices = @transform_4, window_bounds = array<i64: 1, 32>}, {pipeline_mode = #tpu.pipeline_mode<synchronous>, transform_indices = @transform_5, window_bounds = array<i64: 32, 16>}, {pipeline_mode = #tpu.pipeline_mode<synchronous>, transform_indices = @transform_6, window_bounds = array<i64: 1, 16>}, {transform_indices = @transform_7, window_bounds = array<i64: 8, 16>}]} {
    %c0 = arith.constant 0 : index
    %c0_0 = arith.constant 0 : index
    %0 = vector.load %arg1[%c0, %c0_0] : memref<8x32xbf16, #tpu.memory_space<vmem>>, vector<8x32xbf16>
    %c0_1 = arith.constant 0 : index
    %c0_2 = arith.constant 0 : index
    %1 = vector.load %arg2[%c0_1, %c0_2] : memref<32x64xbf16, #tpu.memory_space<vmem>>, vector<32x64xbf16>
    %cst = arith.constant dense<0.000000e+00> : vector<8x64xf32>
    %2 = tpu.matmul %0, %1, %cst {dimension_numbers = #tpu.dot_dimension_numbers<[1], [0], [0], [1], [0, 0, 1, 1], [], []>} : vector<8x32xbf16>, vector<32x64xbf16>, vector<8x64xf32> -> vector<8x64xf32>
    %c0_3 = arith.constant 0 : index
    %c0_4 = arith.constant 0 : index
    %3 = vector.load %arg3[%c0_3, %c0_4] : memref<1x64xf32, #tpu.memory_space<vmem>>, vector<1x64xf32>
    %4 = vector.broadcast %3 : vector<1x64xf32> to vector<8x64xf32>
    %5 = arith.addf %2, %4 : vector<8x64xf32>
    %cst_5 = arith.constant 0.000000e+00 : f32
    %6 = vector.broadcast %cst_5 : f32 to vector<8x64xf32>
    %7 = arith.maximumf %5, %6 : vector<8x64xf32>
    %8 = arith.truncf %7 : vector<8x64xf32> to vector<8x64xbf16>
    %c0_6 = arith.constant 0 : index
    %c0_7 = arith.constant 0 : index
    %9 = vector.load %arg4[%c0_6, %c0_7] : memref<64x32xbf16, #tpu.memory_space<vmem>>, vector<64x32xbf16>
    %cst_8 = arith.constant dense<0.000000e+00> : vector<8x32xf32>
    %10 = tpu.matmul %8, %9, %cst_8 {dimension_numbers = #tpu.dot_dimension_numbers<[1], [0], [0], [1], [0, 0, 1, 1], [], []>} : vector<8x64xbf16>, vector<64x32xbf16>, vector<8x32xf32> -> vector<8x32xf32>
    %c0_9 = arith.constant 0 : index
    %c0_10 = arith.constant 0 : index
    %11 = vector.load %arg5[%c0_9, %c0_10] : memref<1x32xf32, #tpu.memory_space<vmem>>, vector<1x32xf32>
    %12 = vector.broadcast %11 : vector<1x32xf32> to vector<8x32xf32>
    %13 = arith.addf %10, %12 : vector<8x32xf32>
    %cst_11 = arith.constant 0.000000e+00 : f32
    %14 = vector.broadcast %cst_11 : f32 to vector<8x32xf32>
    %15 = arith.maximumf %13, %14 : vector<8x32xf32>
    %16 = arith.truncf %15 : vector<8x32xf32> to vector<8x32xbf16>
    %c0_12 = arith.constant 0 : index
    %c0_13 = arith.constant 0 : index
    %17 = vector.load %arg6[%c0_12, %c0_13] : memref<32x16xbf16, #tpu.memory_space<vmem>>, vector<32x16xbf16>
    %cst_14 = arith.constant dense<0.000000e+00> : vector<8x16xf32>
    %18 = tpu.matmul %16, %17, %cst_14 {dimension_numbers = #tpu.dot_dimension_numbers<[1], [0], [0], [1], [0, 0, 1, 1], [], []>} : vector<8x32xbf16>, vector<32x16xbf16>, vector<8x16xf32> -> vector<8x16xf32>
    %c0_15 = arith.constant 0 : index
    %c0_16 = arith.constant 0 : index
    %19 = vector.load %arg7[%c0_15, %c0_16] : memref<1x16xf32, #tpu.memory_space<vmem>>, vector<1x16xf32>
    %20 = vector.broadcast %19 : vector<1x16xf32> to vector<8x16xf32>
    %21 = arith.addf %18, %20 : vector<8x16xf32>
    %cst_17 = arith.constant 0.000000e+00 : f32
    %22 = vector.broadcast %cst_17 : f32 to vector<8x16xf32>
    %23 = arith.maximumf %21, %22 : vector<8x16xf32>
    %24 = arith.truncf %23 : vector<8x16xf32> to vector<8x16xbf16>
    %c0_18 = arith.constant 0 : index
    %c0_19 = arith.constant 0 : index
    %25 = vector.load %arg8[%c0_18, %c0_19] : memref<8x16xbf16, #tpu.memory_space<vmem>>, vector<8x16xbf16>
    tpu.vector_store %arg8[%c0_18, %c0_19], %24 {strides = array<i32>} : memref<8x16xbf16, #tpu.memory_space<vmem>>, vector<8x16xbf16>,
    return
  }
  func.func @transform_0(%arg0: i32) -> (i32, i32) {
    %c0_i32 = arith.constant 0 : i32
    %c0_i32_0 = arith.constant 0 : i32
    return %arg0, %c0_i32 : i32, i32
  }
  func.func @transform_1(%arg0: i32) -> (i32, i32) {
    %c0_i32 = arith.constant 0 : i32
    %c0_i32_0 = arith.constant 0 : i32
    %c0_i32_1 = arith.constant 0 : i32
    return %c0_i32, %c0_i32_0 : i32, i32
  }
  func.func @transform_2(%arg0: i32) -> (i32, i32) {
    %c0_i32 = arith.constant 0 : i32
    %c0_i32_0 = arith.constant 0 : i32
    %c0_i32_1 = arith.constant 0 : i32
    return %c0_i32, %c0_i32_0 : i32, i32
  }
  func.func @transform_3(%arg0: i32) -> (i32, i32) {
    %c0_i32 = arith.constant 0 : i32
    %c0_i32_0 = arith.constant 0 : i32
    %c0_i32_1 = arith.constant 0 : i32
    return %c0_i32, %c0_i32_0 : i32, i32
  }
  func.func @transform_4(%arg0: i32) -> (i32, i32) {
    %c0_i32 = arith.constant 0 : i32
    %c0_i32_0 = arith.constant 0 : i32
    %c0_i32_1 = arith.constant 0 : i32
    return %c0_i32, %c0_i32_0 : i32, i32
  }
  func.func @transform_5(%arg0: i32) -> (i32, i32) {
    %c0_i32 = arith.constant 0 : i32
    %c0_i32_0 = arith.constant 0 : i32
    %c0_i32_1 = arith.constant 0 : i32
    return %c0_i32, %c0_i32_0 : i32, i32
  }
  func.func @transform_6(%arg0: i32) -> (i32, i32) {
    %c0_i32 = arith.constant 0 : i32
    %c0_i32_0 = arith.constant 0 : i32
    %c0_i32_1 = arith.constant 0 : i32
    return %c0_i32, %c0_i32_0 : i32, i32
  }
  func.func @transform_7(%arg0: i32) -> (i32, i32) {
    %c0_i32 = arith.constant 0 : i32
    %c0_i32_0 = arith.constant 0 : i32
    return %arg0, %c0_i32 : i32, i32
  }
}

</mosaic_0001>

<llo_original>
// kernel: comp_fnn_forward.1
$region0: #{comp_fnn_forward.1}
  #allocation0 [shape = 'u32[]', space=smem, size = 0x4, offset = 0x4, fixed_abs, tag = 'smem constant byte address 0x4 - core index']
  #allocation1 [shape = 'u32[144,128]{1,0:T(1,128)}', space=vmem, size = 0x12000, scoped, tag = 'internal scratch']
  %s0 = inlined_call_operand.vmem [shape: bf16[8,32], index: 0, kind: input, shape index: {}]
  %s1 = inlined_call_operand.vmem [shape: bf16[32,64], index: 1, kind: input, shape index: {}]
  %s2 = inlined_call_operand.vmem [shape: f32[1,64], index: 2, kind: input, shape index: {}]
  %s3 = inlined_call_operand.vmem [shape: bf16[64,32], index: 3, kind: input, shape index: {}]
  %s4 = inlined_call_operand.vmem [shape: f32[1,32], index: 4, kind: input, shape index: {}]
  %s5 = inlined_call_operand.vmem [shape: bf16[32,16], index: 5, kind: input, shape index: {}]
  %s6 = inlined_call_operand.vmem [shape: f32[1,16], index: 6, kind: input, shape index: {}]
  %s7 = inlined_call_operand.hbm [shape: bf16[8,16], index: 7, kind: output, shape index: {}]
  %s8 = sld [smem:[#allocation0]]
  $region38: #{comp_fnn_forward.1} parent=0
    _
  %s10 = ssub.s32 1, %s8
  %s11 = scalar_select 0, %s10, %s8
  $region1: #{comp_fnn_forward.1} parent=0
    #allocation2 [shape = 'u8[2048]{0}', space=vmem, size = 0x800, scoped, tag = 'output window, operand 0, single buffered']
    #allocation3 [shape = 's32[1]{0}', space=sflag, size = 0x4, scoped, tag = 'scoped memory for comp_fnn_forward.1']
    %12 = vsyncpa [#allocation3], 0
    // Predicated region
    $region2: #{comp_fnn_forward.1} parent=1 // pred_check
      _
    $region3: #{comp_fnn_forward.1} parent=1 // pred_check_branch
      %14 = sbr.rel (0) target = $region5
    $region4: #{comp_fnn_forward.1} parent=1 // pred_region
      _
    $region5: #{comp_fnn_forward.1} parent=1 // pred_fallthru
      _
    // Predicated region
    $region6: #{comp_fnn_forward.1} parent=1 // pred_check
      _
    $region7: #{comp_fnn_forward.1} parent=1 // pred_check_branch
      %16 = sbr.rel (0) target = $region9
    $region8: #{comp_fnn_forward.1} parent=1 // pred_region
      _
    $region9: #{comp_fnn_forward.1} parent=1 // pred_fallthru
      _
    // Predicated region
    $region10: #{comp_fnn_forward.1} parent=1 // pred_check
      _
    $region11: #{comp_fnn_forward.1} parent=1 // pred_check_branch
      %18 = sbr.rel (0) target = $region13
    $region12: #{comp_fnn_forward.1} parent=1 // pred_region
      _
    $region13: #{comp_fnn_forward.1} parent=1 // pred_fallthru
      _
    // Predicated region
    $region14: #{comp_fnn_forward.1} parent=1 // pred_check
      _
    $region15: #{comp_fnn_forward.1} parent=1 // pred_check_branch
      %20 = sbr.rel (0) target = $region17
    $region16: #{comp_fnn_forward.1} parent=1 // pred_region
      _
    $region17: #{comp_fnn_forward.1} parent=1 // pred_fallthru
      _
    // Predicated region
    $region18: #{comp_fnn_forward.1} parent=1 // pred_check
      _
    $region19: #{comp_fnn_forward.1} parent=1 // pred_check_branch
      %22 = sbr.rel (0) target = $region21
    $region20: #{comp_fnn_forward.1} parent=1 // pred_region
      _
    $region21: #{comp_fnn_forward.1} parent=1 // pred_fallthru
      _
    // Predicated region
    $region22: #{comp_fnn_forward.1} parent=1 // pred_check
      _
    $region23: #{comp_fnn_forward.1} parent=1 // pred_check_branch
      %24 = sbr.rel (0) target = $region25
    $region24: #{comp_fnn_forward.1} parent=1 // pred_region
      _
    $region25: #{comp_fnn_forward.1} parent=1 // pred_fallthru
      _
    // Predicated region
    $region26: #{comp_fnn_forward.1} parent=1 // pred_check
      _
    $region27: #{comp_fnn_forward.1} parent=1 // pred_check_branch
      %26 = sbr.rel (0) target = $region29
    $region28: #{comp_fnn_forward.1} parent=1 // pred_region
      _
    $region29: #{comp_fnn_forward.1} parent=1 // pred_fallthru
      _
    %v28 = vld [vmem:[%s0] sm:$0xf]
    %v29 = vld [vmem:[%s1] sm:$0xf]
    %v30 = vld [vmem:[%s1 + $0x4] sm:$0xf]
    %v31 = vld [vmem:[%s1 + $0x8] sm:$0xf]
    %v32 = vld [vmem:[%s1 + $0xc] sm:$0xf]
    %v33 = vld [vmem:[%s2] sm:$0x1]
    %v35 = vlaneseq
    %v36 = vshrl.u32 %v35, 7
    %v37 = vsub.s32 0, %v36
    %v38 = vrot.slane %v33, %v37
    %v44 = vunpack.c.l.b16 %v29
    %v45 = vunpack.c.l.b16 %v30
    %v46 = vunpack.c.l.b16 %v31
    %v47 = vunpack.c.l.b16 %v32
    %v48 = vpack.c.b16 %v45, %v44
    %v49 = vpack.c.b16 %v47, %v46
    %vm52 = vcmask 261120
    %v54 = vsel %vm52, %v28, 0
    %56 = vmatprep.subr.bf16.mxu0 0
    %57 = vmatpush1.bf16.msra.mxu0 %v48
    %58 = vmatprep.subr.bf16.mxu0 0
    %59 = vmatpush1.bf16.msra.mxu0 %v49
    %60 = vmatprep.subr.bf16.mxu0 0
    %61 = vmatpush1.bf16.msra.mxu0 0
    %62 = vmatprep.subr.bf16.mxu0 0
    %63 = vmatpush1.bf16.msra.mxu0 0
    %64 = vmatprep.subr.bf16.mxu0 0
    %65 = vmatpush1.bf16.msra.mxu0 0
    %66 = vmatprep.subr.bf16.mxu0 0
    %67 = vmatpush1.bf16.msra.mxu0 0
    %68 = vmatprep.subr.bf16.mxu0 0
    %69 = vmatpush1.bf16.msra.mxu0 0
    %70 = vmatprep.subr.bf16.mxu0 0
    %71 = vmatpush1.bf16.msra.mxu0 0
    %72 = vmatprep.subr.bf16.mxu0 0
    %73 = vmatpush1.bf16.msra.mxu0 0
    %74 = vmatprep.subr.bf16.mxu0 0
    %75 = vmatpush1.bf16.msra.mxu0 0
    %76 = vmatprep.subr.bf16.mxu0 0
    %77 = vmatpush1.bf16.msra.mxu0 0
    %78 = vmatprep.subr.bf16.mxu0 0
    %79 = vmatpush1.bf16.msra.mxu0 0
    %80 = vmatprep.subr.bf16.mxu0 0
    %81 = vmatpush1.bf16.msra.mxu0 0
    %82 = vmatprep.subr.bf16.mxu0 0
    %83 = vmatpush1.bf16.msra.mxu0 0
    %84 = vmatprep.subr.bf16.mxu0 0
    %85 = vmatpush1.bf16.msra.mxu0 0
    %86 = vmatprep.subr.bf16.mxu0 0
    %87 = vmatpush1.bf16.msra.mxu0 0
    %88 = vmatprep.mubr.bf16.mxu0 0
    %89 = vmatmul.mubr.bf16.gmra.mrb[0].mxu0 %v54
    %v90 = vpop.f32.mrb[0].mxu0
    %v91 = vadd.f32 %v38, %v90
    %v92 = vpop.f32.mrb[0].mxu0
    %v93 = vpop.f32.mrb[0].mxu0
    %v94 = vpop.f32.mrb[0].mxu0
    %95 = vdwg.mxu0
    %v96 = vmax.f32 %v91, 0.0
    %v97 = vpack.c.bf16 %v96, %v96
    %v98 = vld [vmem:[%s3] sm:$0xf]
    %v99 = vld [vmem:[%s3 + $0x4] sm:$0xf]
    %v100 = vld [vmem:[%s3 + $0x8] sm:$0xf]
    %v101 = vld [vmem:[%s3 + $0xc] sm:$0xf]
    %v102 = vld [vmem:[%s3 + $0x10] sm:$0xf]
    %v103 = vld [vmem:[%s3 + $0x14] sm:$0xf]
    %v104 = vld [vmem:[%s3 + $0x18] sm:$0xf]
    %v105 = vld [vmem:[%s3 + $0x1c] sm:$0xf]
    %v106 = vld [vmem:[%s4] sm:$0x1]
    %v108 = vlaneseq
    %v109 = vshrl.u32 %v108, 7
    %v110 = vsub.s32 0, %v109
    %v111 = vrot.slane %v106, %v110
    %v121 = vunpack.c.l.b16 %v98
    %v122 = vunpack.c.l.b16 %v99
    %v123 = vunpack.c.l.b16 %v100
    %v124 = vunpack.c.l.b16 %v101
    %v125 = vunpack.c.l.b16 %v102
    %v126 = vunpack.c.l.b16 %v103
    %v127 = vunpack.c.l.b16 %v104
    %v128 = vunpack.c.l.b16 %v105
    %v129 = vpack.c.b16 %v122, %v121
    %v130 = vpack.c.b16 %v124, %v123
    %v131 = vpack.c.b16 %v126, %v125
    %v132 = vpack.c.b16 %v128, %v127
    %vm137 = vcmask 523264
    %v139 = vsel %vm137, %v97, 0
    %141 = vmatprep.subr.bf16.mxu0 0
    %142 = vmatpush1.bf16.msra.mxu0 %v129
    %143 = vmatprep.subr.bf16.mxu0 0
    %144 = vmatpush1.bf16.msra.mxu0 %v130
    %145 = vmatprep.subr.bf16.mxu0 0
    %146 = vmatpush1.bf16.msra.mxu0 %v131
    %147 = vmatprep.subr.bf16.mxu0 0
    %148 = vmatpush1.bf16.msra.mxu0 %v132
    %149 = vmatprep.subr.bf16.mxu0 0
    %150 = vmatpush1.bf16.msra.mxu0 0
    %151 = vmatprep.subr.bf16.mxu0 0
    %152 = vmatpush1.bf16.msra.mxu0 0
    %153 = vmatprep.subr.bf16.mxu0 0
    %154 = vmatpush1.bf16.msra.mxu0 0
    %155 = vmatprep.subr.bf16.mxu0 0
    %156 = vmatpush1.bf16.msra.mxu0 0
    %157 = vmatprep.subr.bf16.mxu0 0
    %158 = vmatpush1.bf16.msra.mxu0 0
    %159 = vmatprep.subr.bf16.mxu0 0
    %160 = vmatpush1.bf16.msra.mxu0 0
    %161 = vmatprep.subr.bf16.mxu0 0
    %162 = vmatpush1.bf16.msra.mxu0 0
    %163 = vmatprep.subr.bf16.mxu0 0
    %164 = vmatpush1.bf16.msra.mxu0 0
    %165 = vmatprep.subr.bf16.mxu0 0
    %166 = vmatpush1.bf16.msra.mxu0 0
    %167 = vmatprep.subr.bf16.mxu0 0
    %168 = vmatpush1.bf16.msra.mxu0 0
    %169 = vmatprep.subr.bf16.mxu0 0
    %170 = vmatpush1.bf16.msra.mxu0 0
    %171 = vmatprep.subr.bf16.mxu0 0
    %172 = vmatpush1.bf16.msra.mxu0 0
    %173 = vmatprep.mubr.bf16.mxu0 0
    %174 = vmatmul.mubr.bf16.gmra.mrb[0].mxu0 %v139
    %v175 = vpop.f32.mrb[0].mxu0
    %v176 = vadd.f32 %v111, %v175
    %v177 = vpop.f32.mrb[0].mxu0
    %v178 = vpop.f32.mrb[0].mxu0
    %v179 = vpop.f32.mrb[0].mxu0
    %180 = vdwg.mxu0
    %v181 = vmax.f32 %v176, 0.0
    %v182 = vpack.c.bf16 %v181, %v181
    %v183 = vld [vmem:[%s5] sm:$0xf]
    %v184 = vld [vmem:[%s5 + $0x4] sm:$0xf]
    %v185 = vld [vmem:[%s5 + $0x8] sm:$0xf]
    %v186 = vld [vmem:[%s5 + $0xc] sm:$0xf]
    %v187 = vld [vmem:[%s6] sm:$0x1]
    %v189 = vlaneseq
    %v190 = vshrl.u32 %v189, 7
    %v191 = vsub.s32 0, %v190
    %v192 = vrot.slane %v187, %v191
    %v198 = vunpack.c.l.b16 %v183
    %v199 = vunpack.c.l.b16 %v184
    %v200 = vunpack.c.l.b16 %v185
    %v201 = vunpack.c.l.b16 %v186
    %v202 = vpack.c.b16 %v199, %v198
    %v203 = vpack.c.b16 %v201, %v200
    %v207 = vsel %vm52, %v182, 0
    %209 = vmatprep.subr.bf16.mxu0 0
    %210 = vmatpush1.bf16.msra.mxu0 %v202
    %211 = vmatprep.subr.bf16.mxu0 0
    %212 = vmatpush1.bf16.msra.mxu0 %v203
    %213 = vmatprep.subr.bf16.mxu0 0
    %214 = vmatpush1.bf16.msra.mxu0 0
    %215 = vmatprep.subr.bf16.mxu0 0
    %216 = vmatpush1.bf16.msra.mxu0 0
    %217 = vmatprep.subr.bf16.mxu0 0
    %218 = vmatpush1.bf16.msra.mxu0 0
    %219 = vmatprep.subr.bf16.mxu0 0
    %220 = vmatpush1.bf16.msra.mxu0 0
    %221 = vmatprep.subr.bf16.mxu0 0
    %222 = vmatpush1.bf16.msra.mxu0 0
    %223 = vmatprep.subr.bf16.mxu0 0
    %224 = vmatpush1.bf16.msra.mxu0 0
    %225 = vmatprep.subr.bf16.mxu0 0
    %226 = vmatpush1.bf16.msra.mxu0 0
    %227 = vmatprep.subr.bf16.mxu0 0
    %228 = vmatpush1.bf16.msra.mxu0 0
    %229 = vmatprep.subr.bf16.mxu0 0
    %230 = vmatpush1.bf16.msra.mxu0 0
    %231 = vmatprep.subr.bf16.mxu0 0
    %232 = vmatpush1.bf16.msra.mxu0 0
    %233 = vmatprep.subr.bf16.mxu0 0
    %234 = vmatpush1.bf16.msra.mxu0 0
    %235 = vmatprep.subr.bf16.mxu0 0
    %236 = vmatpush1.bf16.msra.mxu0 0
    %237 = vmatprep.subr.bf16.mxu0 0
    %238 = vmatpush1.bf16.msra.mxu0 0
    %239 = vmatprep.subr.bf16.mxu0 0
    %240 = vmatpush1.bf16.msra.mxu0 0
    %241 = vmatprep.mubr.bf16.mxu0 0
    %242 = vmatmul.mubr.bf16.gmra.mrb[0].mxu0 %v207
    %v243 = vpop.f32.mrb[0].mxu0
    %v244 = vadd.f32 %v192, %v243
    %v245 = vpop.f32.mrb[0].mxu0
    %v246 = vpop.f32.mrb[0].mxu0
    %v247 = vpop.f32.mrb[0].mxu0
    %248 = vdwg.mxu0
    %v249 = vmax.f32 %v244, 0.0
    %v250 = vpack.c.bf16 %v249, %v249
    %vm251 = vcmask 125952
    %252 = vst.msk [vmem:[#allocation2] sm:$0xf] %vm251, %v250
    // Predicated region
    $region30: #{comp_fnn_forward.1} parent=1 // pred_check
      _
    $region31: #{comp_fnn_forward.1} parent=1 // pred_check_branch
      %254 = sbr.rel (0) target = $region33
    $region32: #{comp_fnn_forward.1} parent=1 // pred_region
      %s256 = ssub.s32 64, 64
      %257 = vsyncadd [#allocation3], %s256
      %s259 = sshll.u32 [#allocation2], 4
      %s260 = int_to_ptr.vmem [resolvable:$true] %s259
      %262 = dma.vmem_to_hbm [thread:$0]  %s260, 64, %s7, [#allocation3]
    $region33: #{comp_fnn_forward.1} parent=1 // pred_fallthru
      _
    // Predicated region
    $region34: #{comp_fnn_forward.1} parent=1 // pred_check
      _
    $region35: #{comp_fnn_forward.1} parent=1 // pred_check_branch
      %264 = sbr.rel (0) target = $region37
    $region36: #{comp_fnn_forward.1} parent=1 // pred_region
      %265 = dma.done [#allocation3], 64
    $region37: #{comp_fnn_forward.1} parent=1 // pred_fallthru
      _
    %266 = vsyncpa [#allocation3], 1

</llo_original>
